<compile_context>
chip_gen: v7x
topology: tpu7x:2x2x1
jax: 0.10.0
libtpu: 0.0.40
codegen_flags: <defaults>
</compile_context>

<pallas_src>
import jax
import jax.numpy as jnp
from jax.experimental import pallas as pl
from jax.experimental.pallas import tpu as pltpu

LANES = 128
SUBLANES = 8
TARGET_BLOCK_BYTES = 2 * 1024 * 1024   # ~2 MiB per input block per grid step
VMEM_LIMIT_BYTES = 32 * 1024 * 1024


def _round_down(x, m):
    return (x // m) * m


def _num_tensorcores():
    # Only v7x-class chips expose 2 TensorCores to one Pallas call; on
    # v5e/v6e a size-2 core axis would serialize and waste HBM traffic.
    try:
        kind = jax.devices()[0].device_kind.lower()
    except Exception:
        return 1
    return 2 if ("7x" in kind or "v7" in kind) else 1


def _make_mse_kernel(tile_rows: int, acc_rows: int, total_rows: int):
    folds = tile_rows // acc_rows

    def kernel(p_ref, t_ref, o_ref):
        c = pl.program_id(0)
        i = pl.program_id(1)

        @pl.when(i == 0)
        def _():
            o_ref[...] = jnp.zeros_like(o_ref)

        # Logical (unclamped) block index; the index_map clamps to stay in
        # bounds, so duplicated/ragged rows are removed by the mask below.
        block_idx = c * pl.num_programs(1) + i
        block_start = block_idx * tile_rows

        d = p_ref[...].astype(jnp.float32) - t_ref[...].astype(jnp.float32)
        sq = d * d

        is_ragged = block_start + tile_rows > total_rows

        @pl.when(jnp.logical_not(is_ragged))
        def _():
            # Hot path: sub, mul, fold-add only; acc_rows//8 independent
            # accumulator vregs let the VALU slots co-issue.
            o_ref[...] += jnp.sum(sq.reshape(folds, acc_rows, LANES), axis=0)

        @pl.when(is_ragged)
        def _():
            # Final / overflow block only: select (not multiply) away rows past
            # the valid extent -- their VMEM contents are unspecified.
            row_ids = block_start + jax.lax.broadcasted_iota(
                jnp.int32, (tile_rows, 1), 0)
            masked = jnp.where(row_ids < total_rows, sq, 0.0)
            o_ref[...] += jnp.sum(masked.reshape(folds, acc_rows, LANES), axis=0)

    return kernel


def _mse_sum_2d(p2d, t2d):
    """Sum of squared differences over a lane-dense (rows, 128) slab."""
    rows = p2d.shape[0]
    itemsize = max(jnp.dtype(p2d.dtype).itemsize, jnp.dtype(t2d.dtype).itemsize)

    acc_rows = 32 if rows >= 32 else SUBLANES
    target_rows = max(acc_rows, TARGET_BLOCK_BYTES // (LANES * itemsize))
    tile_rows = max(acc_rows, _round_down(min(target_rows, rows), acc_rows))

    num_blocks = pl.cdiv(rows, tile_rows)
    num_cores = _num_tensorcores()
    if num_blocks < 2:
        num_cores = 1
    blocks_per_core = pl.cdiv(num_blocks, num_cores)

    def in_map(c, i):
        # Clamp so overflow blocks (fully masked in-kernel) stay in bounds.
        return (jnp.minimum(c * blocks_per_core + i, num_blocks - 1), 0)

    core_sem = pltpu.CORE_PARALLEL if num_cores > 1 else pltpu.ARBITRARY

    bytes_accessed = (p2d.size * jnp.dtype(p2d.dtype).itemsize
                      + t2d.size * jnp.dtype(t2d.dtype).itemsize
                      + num_cores * acc_rows * LANES * 4)
    cost = pl.CostEstimate(flops=3 * p2d.size, transcendentals=0,
                           bytes_accessed=bytes_accessed)

    partials = pl.pallas_call(
        _make_mse_kernel(tile_rows, acc_rows, rows),
        out_shape=jax.ShapeDtypeStruct((num_cores * acc_rows, LANES),
                                       jnp.float32),
        grid_spec=pltpu.PrefetchScalarGridSpec(
            num_scalar_prefetch=0,
            grid=(num_cores, blocks_per_core),
            in_specs=[
                pl.BlockSpec((tile_rows, LANES), in_map),
                pl.BlockSpec((tile_rows, LANES), in_map),
            ],
            out_specs=pl.BlockSpec((acc_rows, LANES), lambda c, i: (c, 0)),
        ),
        compiler_params=pltpu.CompilerParams(
            dimension_semantics=(core_sem, pltpu.ARBITRARY),
            vmem_limit_bytes=VMEM_LIMIT_BYTES,
        ),
        cost_estimate=cost,
    )(p2d, t2d)

    # Single cross-lane reduce of the per-core (acc_rows, 128) partial sums.
    return jnp.sum(partials)


def mse_loss(predictions, targets):
    """nn.MSELoss(reduction='mean') — exact semantics of the PyTorch module."""
    assert predictions.shape == targets.shape
    n_elem = predictions.size

    p_flat = predictions.reshape(-1)
    t_flat = targets.reshape(-1)

    main_len = _round_down(n_elem, LANES)
    rows = main_len // LANES

    total = jnp.float32(0.0)
    if rows >= SUBLANES:
        if main_len == n_elem:
            # Common case: pure reshape (bitcast), zero copies.
            p2d = p_flat.reshape(rows, LANES)
            t2d = t_flat.reshape(rows, LANES)
        else:
            # Lane-misaligned size: slice off the main slab, handle the <128
            # element tail below in plain JAX (no full-array zero padding).
            p2d = p_flat[:main_len].reshape(rows, LANES)
            t2d = t_flat[:main_len].reshape(rows, LANES)
        total = total + _mse_sum_2d(p2d, t2d)
        tail_start = main_len
    else:
        # Too small for a single (8,128) tile: plain JAX handles everything.
        tail_start = 0

    if tail_start < n_elem:
        tp = p_flat[tail_start:].astype(jnp.float32)
        tt = t_flat[tail_start:].astype(jnp.float32)
        total = total + jnp.sum((tp - tt) ** 2)

    return (total / jnp.float32(n_elem)).astype(jnp.float32)


class LossFunction:
    """JAX/Pallas equivalent of the PyTorch LossFunction module."""

    def __init__(self):
        self.lambda_loss_true = 5.0  # unused in forward, kept for parity
        self._fn = jax.jit(mse_loss)

    def __call__(self, predictions, targets):
        return self._fn(predictions, targets)


if __name__ == "__main__":
    key = jax.random.PRNGKey(0)
    k1, k2 = jax.random.split(key)
    # Small NCHW shapes consistent with a generic prediction/target pair.
    predictions = jax.random.normal(k1, (2, 4, 16, 16), dtype=jnp.float32)
    targets = jax.random.normal(k2, (2, 4, 16, 16), dtype=jnp.float32)

    loss_fn = LossFunction()
    out = loss_fn(predictions, targets)
    out = jax.block_until_ready(out)

    # Cross-check against plain-JAX reference.
    ref = jnp.mean((predictions - targets) ** 2)
    assert jnp.allclose(out, ref, rtol=1e-5, atol=1e-6), (out, ref)

    print("KERNEL_OK")
</pallas_src>

<mosaic_0001>
module attributes {stable_mosaic.version = 11 : i64} {
  func.func @kernel(%arg0: i32, %arg1: i32, %arg2: memref<16x128xf32, #tpu.memory_space<vmem>>, %arg3: memref<16x128xf32, #tpu.memory_space<vmem>>, %arg4: memref<8x128xf32, #tpu.memory_space<vmem>>) attributes {dimension_semantics = [#tpu.dimension_semantics<arbitrary>, #tpu.dimension_semantics<arbitrary>], iteration_bounds = array<i64: 1, 1>, scalar_prefetch = 0 : i64, scratch_operands = 0 : i64, tpu.core_type = #tpu.core_type<tc>, window_params = [{transform_indices = @transform_0, window_bounds = array<i64: 16, 128>}, {transform_indices = @transform_1, window_bounds = array<i64: 16, 128>}, {transform_indices = @transform_2, window_bounds = array<i64: 8, 128>}]} {
    %c0_i32 = arith.constant 0 : i32
    %0 = arith.cmpi eq, %arg1, %c0_i32 : i32
    %1 = arith.extui %0 : i1 to i32
    %c0_i32_0 = arith.constant 0 : i32
    %2 = arith.cmpi ne, %1, %c0_i32_0 : i32
    scf.if %2 {
      %cst = arith.constant 0.000000e+00 : f32
      %17 = vector.broadcast %cst : f32 to vector<8x128xf32>
      %c0_8 = arith.constant 0 : index
      %c0_9 = arith.constant 0 : index
      %18 = vector.load %arg4[%c0_8, %c0_9] : memref<8x128xf32, #tpu.memory_space<vmem>>, vector<8x128xf32>
      tpu.vector_store %arg4[%c0_8, %c0_9], %17 {strides = array<i32>} : memref<8x128xf32, #tpu.memory_space<vmem>>, vector<8x128xf32>,
    } else {
    }
    %c1_i32 = arith.constant 1 : i32
    %3 = arith.muli %arg0, %c1_i32 : i32
    %4 = arith.addi %3, %arg1 : i32
    %c16_i32 = arith.constant 16 : i32
    %5 = arith.muli %4, %c16_i32 : i32
    %c0 = arith.constant 0 : index
    %c0_1 = arith.constant 0 : index
    %6 = vector.load %arg2[%c0, %c0_1] : memref<16x128xf32, #tpu.memory_space<vmem>>, vector<16x128xf32>
    %c0_2 = arith.constant 0 : index
    %c0_3 = arith.constant 0 : index
    %7 = vector.load %arg3[%c0_2, %c0_3] : memref<16x128xf32, #tpu.memory_space<vmem>>, vector<16x128xf32>
    %8 = arith.subf %6, %7 : vector<16x128xf32>
    %9 = arith.mulf %8, %8 : vector<16x128xf32>
    %c16_i32_4 = arith.constant 16 : i32
    %10 = arith.addi %5, %c16_i32_4 : i32
    %c16_i32_5 = arith.constant 16 : i32
    %11 = arith.cmpi sgt, %10, %c16_i32_5 : i32
    %true = arith.constant true
    %12 = arith.xori %11, %true : i1
    %13 = arith.extui %12 : i1 to i32
    %c0_i32_6 = arith.constant 0 : i32
    %14 = arith.cmpi ne, %13, %c0_i32_6 : i32
    scf.if %14 {
      %c0_8 = arith.constant 0 : index
      %c0_9 = arith.constant 0 : index
      %17 = vector.load %arg4[%c0_8, %c0_9] : memref<8x128xf32, #tpu.memory_space<vmem>>, vector<8x128xf32>
      %18 = vector.shape_cast %9 : vector<16x128xf32> to vector<2x8x128xf32>
      %cst = arith.constant dense<0.000000e+00> : vector<8x128xf32>
      %19 = vector.multi_reduction <add>, %18, %cst [0] : vector<2x8x128xf32> to vector<8x128xf32>
      %20 = arith.addf %17, %19 : vector<8x128xf32>
      %c0_10 = arith.constant 0 : index
      %c0_11 = arith.constant 0 : index
      %21 = vector.load %arg4[%c0_10, %c0_11] : memref<8x128xf32, #tpu.memory_space<vmem>>, vector<8x128xf32>
      tpu.vector_store %arg4[%c0_10, %c0_11], %20 {strides = array<i32>} : memref<8x128xf32, #tpu.memory_space<vmem>>, vector<8x128xf32>,
    } else {
    }
    %15 = arith.extui %11 : i1 to i32
    %c0_i32_7 = arith.constant 0 : i32
    %16 = arith.cmpi ne, %15, %c0_i32_7 : i32
    scf.if %16 {
      %17 = tpu.iota {dimensions = array<i32: 0>} : vector<16x1xi32>
      %18 = vector.broadcast %5 : i32 to vector<16x1xi32>
      %19 = arith.addi %18, %17 : vector<16x1xi32>
      %c16_i32_8 = arith.constant 16 : i32
      %20 = vector.broadcast %c16_i32_8 : i32 to vector<16x1xi32>
      %21 = arith.cmpi slt, %19, %20 : vector<16x1xi32>
      %cst = arith.constant 0.000000e+00 : f32
      %22 = vector.shape_cast %21 : vector<16x1xi1> to vector<16x1xi1>
      %23 = vector.broadcast %22 : vector<16x1xi1> to vector<16x128xi1>
      %24 = vector.broadcast %cst : f32 to vector<16x128xf32>
      %25 = arith.select %23, %9, %24 : vector<16x128xi1>, vector<16x128xf32>
      %c0_9 = arith.constant 0 : index
      %c0_10 = arith.constant 0 : index
      %26 = vector.load %arg4[%c0_9, %c0_10] : memref<8x128xf32, #tpu.memory_space<vmem>>, vector<8x128xf32>
      %27 = vector.shape_cast %25 : vector<16x128xf32> to vector<2x8x128xf32>
      %cst_11 = arith.constant dense<0.000000e+00> : vector<8x128xf32>
      %28 = vector.multi_reduction <add>, %27, %cst_11 [0] : vector<2x8x128xf32> to vector<8x128xf32>
      %29 = arith.addf %26, %28 : vector<8x128xf32>
      %c0_12 = arith.constant 0 : index
      %c0_13 = arith.constant 0 : index
      %30 = vector.load %arg4[%c0_12, %c0_13] : memref<8x128xf32, #tpu.memory_space<vmem>>, vector<8x128xf32>
      tpu.vector_store %arg4[%c0_12, %c0_13], %29 {strides = array<i32>} : memref<8x128xf32, #tpu.memory_space<vmem>>, vector<8x128xf32>,
    } else {
    }
    return
  }
  func.func @transform_0(%arg0: i32, %arg1: i32) -> (i32, i32) {
    %c1_i32 = arith.constant 1 : i32
    %0 = arith.muli %arg0, %c1_i32 : i32
    %1 = arith.addi %0, %arg1 : i32
    %c0_i32 = arith.constant 0 : i32
    %2 = arith.minsi %1, %c0_i32 : i32
    %c0_i32_0 = arith.constant 0 : i32
    %c0_i32_1 = arith.constant 0 : i32
    return %2, %c0_i32_0 : i32, i32
  }
  func.func @transform_1(%arg0: i32, %arg1: i32) -> (i32, i32) {
    %c1_i32 = arith.constant 1 : i32
    %0 = arith.muli %arg0, %c1_i32 : i32
    %1 = arith.addi %0, %arg1 : i32
    %c0_i32 = arith.constant 0 : i32
    %2 = arith.minsi %1, %c0_i32 : i32
    %c0_i32_0 = arith.constant 0 : i32
    %c0_i32_1 = arith.constant 0 : i32
    return %2, %c0_i32_0 : i32, i32
  }
  func.func @transform_2(%arg0: i32, %arg1: i32) -> (i32, i32) {
    %c0_i32 = arith.constant 0 : i32
    %c0_i32_0 = arith.constant 0 : i32
    return %arg0, %c0_i32 : i32, i32
  }
}

</mosaic_0001>

<llo_original>
// kernel: mse_loss.1
$region0: #{mse_loss.1}
  #allocation0 [shape = 'u32[]', space=smem, size = 0x4, offset = 0x4, fixed_abs, tag = 'smem constant byte address 0x4 - core index']
  #allocation1 [shape = 'u32[144,128]{1,0:T(1,128)}', space=vmem, size = 0x12000, scoped, tag = 'internal scratch']
  %s0 = inlined_call_operand.vmem [shape: f32[16,128], index: 0, kind: input, shape index: {}]
  %s1 = inlined_call_operand.vmem [shape: f32[16,128], index: 1, kind: input, shape index: {}]
  %s2 = inlined_call_operand.vmem [shape: f32[8,128], index: 2, kind: output, shape index: {}]
  %s3 = sld [smem:[#allocation0]]
  $region30: #{mse_loss.1} parent=0
    _
  %s5 = ssub.s32 1, %s3
  %s6 = scalar_select 0, %s5, %s3
  // Predicated region
  $region2: #{mse_loss.1} parent=0 // pred_check
    _
  $region3: #{mse_loss.1} parent=0 // pred_check_branch
    %8 = sbr.rel (0) target = $region5
  $region4: #{mse_loss.1} parent=0 // pred_region
    %s9 = sadd.s32 0, 0
    %p10 = scmp.lt.s32.totalorder %s9, 0
    %s11 = scalar_select %p10, %s9, 0
    %s12 = smul.u32 2, %s11
    %p13 = scmp.lt.s32.totalorder %s12, 1
    %s14 = scalar_select %p13, %s12, 1
    %s15 = smul.addr %s14, 8
    %s16 = scalar_lea.vmem %s0, %s15
    %s17 = sadd.s32 0, 0
    %p18 = scmp.lt.s32.totalorder %s17, 0
    %s19 = scalar_select %p18, %s17, 0
    %s20 = smul.u32 2, %s19
  $region5: #{mse_loss.1} parent=0 // pred_fallthru
    _
  // Predicated region
  $region6: #{mse_loss.1} parent=0 // pred_check
    _
  $region7: #{mse_loss.1} parent=0 // pred_check_branch
    %22 = sbr.rel (0) target = $region9
  $region8: #{mse_loss.1} parent=0 // pred_region
    %s23 = sadd.s32 0, 0
    %p24 = scmp.lt.s32.totalorder %s23, 0
    %s25 = scalar_select %p24, %s23, 0
    %s26 = smul.u32 2, %s25
    %p27 = scmp.lt.s32.totalorder %s26, 1
    %s28 = scalar_select %p27, %s26, 1
    %s29 = smul.addr %s28, 8
    %s30 = scalar_lea.vmem %s1, %s29
    %s31 = sadd.s32 0, 0
    %p32 = scmp.lt.s32.totalorder %s31, 0
    %s33 = scalar_select %p32, %s31, 0
    %s34 = smul.u32 2, %s33
  $region9: #{mse_loss.1} parent=0 // pred_fallthru
    _
  %s35 = sadd.s32 0, 0
  %p36 = scmp.lt.s32.totalorder %s35, 0
  %s37 = scalar_select %p36, %s35, 0
  %s38 = smul.u32 2, %s37
  %p39 = scmp.lt.s32.totalorder %s38, 1
  %s40 = scalar_select %p39, %s38, 1
  %s41 = smul.addr %s40, 8
  %s42 = scalar_lea.vmem %s0, %s41
  %s43 = sadd.s32 0, 0
  %p44 = scmp.lt.s32.totalorder %s43, 0
  %s45 = scalar_select %p44, %s43, 0
  %s46 = smul.u32 2, %s45
  %p47 = scmp.lt.s32.totalorder %s46, 1
  %s48 = scalar_select %p47, %s46, 1
  %s49 = smul.addr %s48, 8
  %s50 = scalar_lea.vmem %s1, %s49
  %s51 = sadd.s32 0, 0
  %p52 = scmp.lt.s32.totalorder %s51, 0
  %s53 = scalar_select %p52, %s51, 0
  %s54 = smul.u32 2, %s53
  %p55 = scmp.lt.s32.totalorder %s54, 1
  %s56 = scalar_select %p55, %s54, 1
  %s57 = smul.addr %s56, 8
  %s58 = scalar_lea.vmem %s0, %s57
  %s59 = sadd.s32 0, 0
  %p60 = scmp.lt.s32.totalorder %s59, 0
  %s61 = scalar_select %p60, %s59, 0
  %s62 = smul.u32 2, %s61
  %s63 = sadd.s32 0, 0
  %p64 = scmp.lt.s32.totalorder %s63, 0
  %s65 = scalar_select %p64, %s63, 0
  %s66 = smul.u32 2, %s65
  %p67 = scmp.lt.s32.totalorder %s66, 1
  %s68 = scalar_select %p67, %s66, 1
  %s69 = smul.addr %s68, 8
  %s70 = scalar_lea.vmem %s1, %s69
  %s71 = sadd.s32 0, 0
  %p72 = scmp.lt.s32.totalorder %s71, 0
  %s73 = scalar_select %p72, %s71, 0
  %s74 = smul.u32 2, %s73
  %p75 = scmp.eq.s32.totalorder 0, 0
  // Predicated region
  $region10: #{mse_loss.1} parent=0 // pred_check
    %p76 = pneg %p75
  $region11: #{mse_loss.1} parent=0 // pred_check_branch
    %78 = sbr.rel (%p76) target = $region13
  $region12: #{mse_loss.1} parent=0 // pred_region
    %79 = vst [vmem:[%s2] sm:$0xff] 0.0
  $region13: #{mse_loss.1} parent=0 // pred_fallthru
    _
  %s80 = sadd.s32 0, 0
  %s81 = smul.u32 %s80, 16
  %v82 = vld [vmem:[%s58] sm:$0xff]
  %v83 = vld [vmem:[%s58 + $0x8] sm:$0xff]
  %v84 = vld [vmem:[%s70] sm:$0xff]
  %v85 = vld [vmem:[%s70 + $0x8] sm:$0xff]
  %v86 = vsub.f32 %v82, %v84
  %v87 = vsub.f32 %v83, %v85
  %v88 = vmul.f32 %v86, %v86
  %v89 = vmul.f32 %v87, %v87
  %s90 = sadd.s32 %s81, 16
  %p91 = scmp.gt.s32.totalorder %s90, 16
  %p92 = scmp.le.s32.totalorder %s90, 16
  // Predicated region
  $region14: #{mse_loss.1} parent=0 // pred_check
    %p93 = pneg %p92
  $region15: #{mse_loss.1} parent=0 // pred_check_branch
    %95 = sbr.rel (%p93) target = $region17
  $region16: #{mse_loss.1} parent=0 // pred_region
    %v96 = vld [vmem:[%s2] sm:$0xff]
    %v97 = vadd.f32 %v88, %v89
    %v98 = vadd.f32 %v96, %v97
    %99 = vst [vmem:[%s2] sm:$0xff] %v98
  $region17: #{mse_loss.1} parent=0 // pred_fallthru
    _
  // Predicated region
  $region18: #{mse_loss.1} parent=0 // pred_check
    %p100 = pneg %p91
  $region19: #{mse_loss.1} parent=0 // pred_check_branch
    %102 = sbr.rel (%p100) target = $region21
  $region20: #{mse_loss.1} parent=0 // pred_region
    %v103 = vlaneseq
    %v104 = vshrl.u32 %v103, 7
    %v105 = vadd.s32 %v104, 8
    %v106 = vstv %s81
    %v107 = vadd.s32 %v106, %v104
    %v108 = vadd.s32 %v106, %v105
    %vm109 = vcmp.lt.s32.totalorder %v107, 16
    %vm110 = vcmp.lt.s32.totalorder %v108, 16
    %v111 = vsel %vm109, 1, 0
    %v112 = vsel %vm110, 1, 0
    %vm113 = vcmp.eq.s32.totalorder %v111, 1
    %vm114 = vcmp.eq.s32.totalorder %v112, 1
    %v115 = vsel %vm113, %v88, 0.0
    %v116 = vsel %vm114, %v89, 0.0
    %v117 = vld [vmem:[%s2] sm:$0xff]
    %v118 = vadd.f32 %v115, %v116
    %v119 = vadd.f32 %v117, %v118
    %120 = vst [vmem:[%s2] sm:$0xff] %v119
  $region21: #{mse_loss.1} parent=0 // pred_fallthru
    _
  // Predicated region
  $region22: #{mse_loss.1} parent=0 // pred_check
    _
  $region23: #{mse_loss.1} parent=0 // pred_check_branch
    %122 = sbr.rel (0) target = $region25
  $region24: #{mse_loss.1} parent=0 // pred_region
    _
  $region25: #{mse_loss.1} parent=0 // pred_fallthru
    _
  // Predicated region
  $region26: #{mse_loss.1} parent=0 // pred_check
    _
  $region27: #{mse_loss.1} parent=0 // pred_check_branch
    %124 = sbr.rel (0) target = $region29
  $region28: #{mse_loss.1} parent=0 // pred_region
    _
  $region29: #{mse_loss.1} parent=0 // pred_fallthru
    _

</llo_original>
